<compile_context>
chip_gen: v6e
topology: v6e:2x2x1
jax: 0.10.0
libtpu: 0.0.40
codegen_flags: <defaults>
</compile_context>

<pallas_src>
import functools
from typing import Any, NamedTuple, Tuple

import jax
import jax.numpy as jnp
from jax.experimental import pallas as pl
from jax.experimental.pallas import tpu as pltpu


def _round_up(n: int, m: int) -> int:
    return ((n + m - 1) // m) * m


def _sublane_pack(dtype) -> int:
    # rows packed per 32-bit sublane group: 8 for f32, 16 for bf16, 32 for int8.
    return 8 * (4 // jnp.dtype(dtype).itemsize)


# ----------------------------------------------------------------------------
# Feature probe: single-buffered (grid-invariant) blocks via pipeline_mode.
# ----------------------------------------------------------------------------
def _probe_kernel(x_ref, o_ref):
    o_ref[...] = x_ref[...]


@functools.lru_cache(maxsize=1)
def _single_buffer_supported() -> bool:
    """True iff this jax supports pipeline_mode=pl.Buffered(1) on a BlockSpec."""
    try:
        w_spec = pl.BlockSpec((8, 128), lambda i: (0, 0),
                              pipeline_mode=pl.Buffered(1))
        out = pl.pallas_call(
            _probe_kernel,
            out_shape=jax.ShapeDtypeStruct((16, 128), jnp.float32),
            grid=(2,),
            in_specs=[w_spec],
            out_specs=pl.BlockSpec((8, 128), lambda i: (i, 0)),
        )(jnp.zeros((8, 128), jnp.float32))
        jax.block_until_ready(out)
        return True
    except Exception:  # pragma: no cover - older jax without pipeline_mode
        return False


# ----------------------------------------------------------------------------
# Kernel
# ----------------------------------------------------------------------------
def _fc_series_kernel(*refs, nlayers: int, relu_last: bool):
    """Fused forward for the whole FC stack on one batch tile.

    refs = (x_ref, w0_ref, b0_ref, w1_ref, b1_ref, ..., o_ref)
      x_ref : (bm, pd0)        VMEM (mm_dtype)
      wi_ref: (pd_i, pd_{i+1}) VMEM (mm_dtype), already transposed (x @ W^T)
      bi_ref: (1, pd_{i+1})    VMEM f32
      o_ref : (bm, pd_last)    VMEM out dtype
    Layer loop statically unrolled; intermediates stay in VMEM/vregs.
    """
    x_ref, o_ref = refs[0], refs[-1]
    wb_refs = refs[1:-1]

    h = x_ref[...]
    for i in range(nlayers):
        w_ref = wb_refs[2 * i]
        b_ref = wb_refs[2 * i + 1]
        acc = jnp.dot(h.astype(w_ref.dtype), w_ref[...],
                      preferred_element_type=jnp.float32)   # MXU, f32 accumulate
        acc = acc + b_ref[...]                               # f32 epilogue (VPU)
        if i < nlayers - 1 or relu_last:
            acc = jnp.maximum(acc, 0.0)
        h = acc
    o_ref[...] = h.astype(o_ref.dtype)


# ----------------------------------------------------------------------------
# Parameter init / one-time prep (hoisted out of the forward pass)
# ----------------------------------------------------------------------------
def init_fc_series_params(key, d_input, layer_dims, initrange=0.1):
    """Matches FCSeries.init_weights: weight ~ U(-0.1, 0.1), bias = 0."""
    all_dims = [d_input] + list(layer_dims)
    params = []
    for i in range(len(layer_dims)):
        key, sub = jax.random.split(key)
        # PyTorch Linear weight shape is (d_out, d_in); store transposed for x @ W^T.
        w = jax.random.uniform(
            sub, (all_dims[i + 1], all_dims[i]),
            minval=-initrange, maxval=initrange, dtype=jnp.float32)
        b = jnp.zeros((all_dims[i + 1],), dtype=jnp.float32)
        params.append((w.T, b))
    return params


class PreparedFCSeries(NamedTuple):
    flat_wb: Tuple[jax.Array, ...]   # (w0p, b0p, w1p, b1p, ...) padded + cast
    dims: Tuple[int, ...]            # logical (d_input, d1, ..., d_last)
    pdims: Tuple[int, ...]           # padded dims
    mm_dtype: Any                    # matmul input dtype (bf16 default)


def prepare_fc_series_params(params, *, use_bf16_matmul=True) -> PreparedFCSeries:
    """One-time padding / cast of the weight stack (do NOT redo this per call)."""
    mm_dtype = jnp.bfloat16 if use_bf16_matmul else jnp.float32
    if len(params) == 0:
        return PreparedFCSeries((), (), (), mm_dtype)
    pack = _sublane_pack(mm_dtype)
    dims = [int(params[0][0].shape[0])] + [int(w_t.shape[1]) for (w_t, _) in params]
    # First contracting dim: pad only to the sublane pack (not 128).  All later
    # feature dims: pad to 128 (lane-dense MXU outputs and unmasked stores).
    pdims = [_round_up(dims[0], pack)] + [_round_up(d, 128) for d in dims[1:]]
    flat = []
    for li, (w_t, b) in enumerate(params):
        pi, po = pdims[li], pdims[li + 1]
        wp = jnp.pad(w_t, ((0, pi - dims[li]), (0, po - dims[li + 1])))
        wp = wp.astype(mm_dtype)
        bp = jnp.pad(b, (0, po - dims[li + 1])).reshape(1, po).astype(jnp.float32)
        flat += [wp, bp]
    return PreparedFCSeries(tuple(flat), tuple(dims), tuple(pdims), mm_dtype)


def _choose_bm(batch: int, block_batch: int, pack: int) -> int:
    """Batch tile: multiple of the sublane pack, <= block_batch, and small
    enough to keep >= 2 grid steps when the batch allows it (so v7x's second
    TensorCore gets work and the input/output pipeline double-buffers)."""
    bm = _round_up(max(min(block_batch, batch), 1), pack)
    if batch > pack:
        half = _round_up(-(-batch // 2), pack)   # ceil(batch/2) rounded up
        bm = min(bm, half)
    return max(bm, pack)


# ----------------------------------------------------------------------------
# Forward
# ----------------------------------------------------------------------------
def fc_series_forward(x, params, *, relu_last=True, block_batch=512,
                      use_bf16_matmul=True, slice_output=True):
    """Pallas implementation of FCSeries.forward (dropout p=0 -> identity).

    `params` may be the raw list from init_fc_series_params (padded/cast per
    call, convenient but slower) or a PreparedFCSeries (recommended: prep once).
    """
    prep = (params if isinstance(params, PreparedFCSeries)
            else prepare_fc_series_params(params, use_bf16_matmul=use_bf16_matmul))
    if len(prep.dims) <= 1:            # nlayers == 0 -> identity, as in the module
        return x

    dims, pdims, mm_dtype = prep.dims, prep.pdims, prep.mm_dtype
    nlayers = len(dims) - 1
    B, d_in = x.shape
    assert d_in == dims[0], f"x feature dim {d_in} != d_input {dims[0]}"

    pack = _sublane_pack(mm_dtype)
    bm = _choose_bm(B, block_batch, pack)
    Bp = _round_up(B, bm)
    out_dtype = x.dtype

    # Pad input (batch to bm multiple, features to the sublane pack) and cast.
    xp = x
    if (Bp, pdims[0]) != (B, d_in):
        xp = jnp.pad(x, ((0, Bp - B), (0, pdims[0] - d_in)))
    xp = xp.astype(mm_dtype)

    # Weights / biases are grid-invariant: constant index_map, and single
    # buffered when the installed jax supports pipeline_mode (halves resident
    # weight VMEM -- matters on v7x's 64 MiB VMEM for wide layers).
    single_buf = _single_buffer_supported()

    def _const_spec(shape):
        if single_buf:
            return pl.BlockSpec(shape, lambda i: (0,) * len(shape),
                                pipeline_mode=pl.Buffered(1))
        return pl.BlockSpec(shape, lambda i: (0,) * len(shape))

    in_specs = [pl.BlockSpec((bm, pdims[0]), lambda i: (i, 0))]
    for li in range(nlayers):
        pi, po = pdims[li], pdims[li + 1]
        in_specs += [_const_spec((pi, po)), _const_spec((1, po))]
    out_spec = pl.BlockSpec((bm, pdims[-1]), lambda i: (i, 0))

    # VMEM budget: resident weights (x buffer count) + double-buffered I/O tiles
    # + f32 intermediate headroom, with 2x margin.  Defaults (16/32 MiB scoped)
    # are far below physical, so set it explicitly.
    mm_itemsize = jnp.dtype(mm_dtype).itemsize
    out_itemsize = jnp.dtype(out_dtype).itemsize
    wb_bytes = sum(int(a.size) * a.dtype.itemsize for a in prep.flat_wb)
    wb_buf = 1 if single_buf else 2
    need = (wb_bytes * wb_buf
            + 2 * bm * pdims[0] * mm_itemsize
            + 2 * bm * pdims[-1] * out_itemsize
            + 2 * bm * max(pdims) * 4)
    vmem_limit = int(min(max(2 * need + (1 << 20), 32 << 20), 112 << 20))
    # TODO(synk): when `need` approaches v7x's 64 MiB physical VMEM (very wide
    # hidden dims), fall back to tiling the widest layer's output-feature dim on
    # an extra grid axis or streaming its weights with pltpu.emit_pipeline
    # instead of keeping the whole stack VMEM-resident.

    flops = 2 * Bp * sum(pdims[i] * pdims[i + 1] for i in range(nlayers))
    bytes_accessed = int(xp.size * mm_itemsize + wb_bytes
                         + Bp * pdims[-1] * out_itemsize)

    out_p = pl.pallas_call(
        functools.partial(_fc_series_kernel, nlayers=nlayers,
                          relu_last=relu_last),
        out_shape=jax.ShapeDtypeStruct((Bp, pdims[-1]), out_dtype),
        grid=(Bp // bm,),
        in_specs=in_specs,
        out_specs=out_spec,
        compiler_params=pltpu.CompilerParams(
            dimension_semantics=("parallel",),     # shard batch tiles on v7x
            vmem_limit_bytes=vmem_limit),
        cost_estimate=pl.CostEstimate(
            flops=flops, transcendentals=0, bytes_accessed=bytes_accessed),
    )(xp, *prep.flat_wb)

    if not slice_output:
        # Zero-padded (Bp, pdims[-1]) result; skipping the slice avoids an extra
        # HBM read+write pass over the whole padded output.
        return out_p
    return out_p[:B, :dims[-1]]


# ----------------------------------------------------------------------------
# Demo / self-check
# ----------------------------------------------------------------------------
if __name__ == "__main__":
    # batch=200 is deliberately not a tile multiple (exercises batch padding and
    # gives a 2-step grid); d_input=32 exercises the small-contracting-dim path.
    batch, d_input = 200, 32
    layer_dims = [64, 32, 16]
    relu_last = True

    key = jax.random.PRNGKey(0)
    kx, kp = jax.random.split(key)
    x = jax.random.normal(kx, (batch, d_input), dtype=jnp.float32)
    params = init_fc_series_params(kp, d_input, layer_dims)

    # Pure-JAX reference (high-precision matmul isolates the kernel's error).
    ref = x
    for i, (w_t, b) in enumerate(params):
        ref = jnp.dot(ref, w_t, precision=jax.lax.Precision.HIGHEST) + b
        if i < len(params) - 1 or relu_last:
            ref = jnp.maximum(ref, 0.0)

    # Default path: bf16 MXU inputs, f32 accumulation, prepared params reused.
    prep_bf16 = prepare_fc_series_params(params, use_bf16_matmul=True)
    out_bf16 = jax.block_until_ready(
        fc_series_forward(x, prep_bf16, relu_last=relu_last))
    assert out_bf16.shape == (batch, layer_dims[-1])
    assert jnp.allclose(out_bf16, ref, atol=2e-2, rtol=5e-2), (
        "bf16 max abs err = %g" % float(jnp.max(jnp.abs(out_bf16 - ref))))

    # f32 MXU path -- tight tolerance.
    prep_f32 = prepare_fc_series_params(params, use_bf16_matmul=False)
    out_f32 = jax.block_until_ready(
        fc_series_forward(x, prep_f32, relu_last=relu_last))
    assert out_f32.shape == (batch, layer_dims[-1])
    assert jnp.allclose(out_f32, ref, atol=1e-4, rtol=1e-4), (
        "f32 max abs err = %g" % float(jnp.max(jnp.abs(out_f32 - ref))))

    # Raw (un-prepared) params path still works.
    out_raw = jax.block_until_ready(
        fc_series_forward(x, params, relu_last=relu_last))
    assert jnp.allclose(out_raw, out_bf16, atol=1e-6, rtol=1e-6)

    # Padded-output fast path agrees on the valid region.
    out_pad = jax.block_until_ready(
        fc_series_forward(x, prep_bf16, relu_last=relu_last, slice_output=False))
    assert jnp.allclose(out_pad[:batch, :layer_dims[-1]], out_bf16, atol=0, rtol=0)

    # nlayers == 0 -> identity, matching the module.
    assert jnp.array_equal(fc_series_forward(x, [], relu_last=relu_last), x)

    print("KERNEL_OK")
</pallas_src>

<mosaic_0001>
module attributes {stable_mosaic.version = 11 : i64} {
  func.func @_probe_kernel(%arg0: i32, %arg1: memref<8x128xf32, #tpu.memory_space<vmem>>, %arg2: memref<8x128xf32, #tpu.memory_space<vmem>>) attributes {dimension_semantics = [#tpu.dimension_semantics<arbitrary>], iteration_bounds = array<i64: 2>, scalar_prefetch = 0 : i64, scratch_operands = 0 : i64, tpu.core_type = #tpu.core_type<tc>, window_params = [{pipeline_mode = #tpu.pipeline_mode<synchronous>, transform_indices = @transform_0, window_bounds = array<i64: 8, 128>}, {transform_indices = @transform_1, window_bounds = array<i64: 8, 128>}]} {
    %c0 = arith.constant 0 : index
    %c0_0 = arith.constant 0 : index
    %0 = vector.load %arg1[%c0, %c0_0] : memref<8x128xf32, #tpu.memory_space<vmem>>, vector<8x128xf32>
    %c0_1 = arith.constant 0 : index
    %c0_2 = arith.constant 0 : index
    %1 = vector.load %arg2[%c0_1, %c0_2] : memref<8x128xf32, #tpu.memory_space<vmem>>, vector<8x128xf32>
    tpu.vector_store %arg2[%c0_1, %c0_2], %0 {strides = array<i32>} : memref<8x128xf32, #tpu.memory_space<vmem>>, vector<8x128xf32>,
    return
  }
  func.func @transform_0(%arg0: i32) -> (i32, i32) {
    %c0_i32 = arith.constant 0 : i32
    %c0_i32_0 = arith.constant 0 : i32
    %c0_i32_1 = arith.constant 0 : i32
    return %c0_i32, %c0_i32_0 : i32, i32
  }
  func.func @transform_1(%arg0: i32) -> (i32, i32) {
    %c0_i32 = arith.constant 0 : i32
    %c0_i32_0 = arith.constant 0 : i32
    return %arg0, %c0_i32 : i32, i32
  }
}

module attributes {stable_mosaic.version = 11 : i64} {
  func.func @_fc_series_kernel(%arg0: i32, %arg1: memref<112x32xbf16, #tpu.memory_space<vmem>>, %arg2: memref<32x128xbf16, #tpu.memory_space<vmem>>, %arg3: memref<1x128xf32, #tpu.memory_space<vmem>>, %arg4: memref<128x128xbf16, #tpu.memory_space<vmem>>, %arg5: memref<1x128xf32, #tpu.memory_space<vmem>>, %arg6: memref<128x128xbf16, #tpu.memory_space<vmem>>, %arg7: memref<1x128xf32, #tpu.memory_space<vmem>>, %arg8: memref<112x128xf32, #tpu.memory_space<vmem>>) attributes {dimension_semantics = [#tpu.dimension_semantics<parallel>], iteration_bounds = array<i64: 2>, scalar_prefetch = 0 : i64, scratch_operands = 0 : i64, tpu.core_type = #tpu.core_type<tc>, window_params = [{transform_indices = @transform_0, window_bounds = array<i64: 112, 32>}, {pipeline_mode = #tpu.pipeline_mode<synchronous>, transform_indices = @transform_1, window_bounds = array<i64: 32, 128>}, {pipeline_mode = #tpu.pipeline_mode<synchronous>, transform_indices = @transform_2, window_bounds = array<i64: 1, 128>}, {pipeline_mode = #tpu.pipeline_mode<synchronous>, transform_indices = @transform_3, window_bounds = array<i64: 128, 128>}, {pipeline_mode = #tpu.pipeline_mode<synchronous>, transform_indices = @transform_4, window_bounds = array<i64: 1, 128>}, {pipeline_mode = #tpu.pipeline_mode<synchronous>, transform_indices = @transform_5, window_bounds = array<i64: 128, 128>}, {pipeline_mode = #tpu.pipeline_mode<synchronous>, transform_indices = @transform_6, window_bounds = array<i64: 1, 128>}, {transform_indices = @transform_7, window_bounds = array<i64: 112, 128>}]} {
    %c0 = arith.constant 0 : index
    %c0_0 = arith.constant 0 : index
    %0 = vector.load %arg1[%c0, %c0_0] : memref<112x32xbf16, #tpu.memory_space<vmem>>, vector<112x32xbf16>
    %c0_1 = arith.constant 0 : index
    %c0_2 = arith.constant 0 : index
    %1 = vector.load %arg2[%c0_1, %c0_2] : memref<32x128xbf16, #tpu.memory_space<vmem>>, vector<32x128xbf16>
    %cst = arith.constant dense<0.000000e+00> : vector<112x128xf32>
    %2 = tpu.matmul %0, %1, %cst {dimension_numbers = #tpu.dot_dimension_numbers<[1], [0], [0], [1], [0, 0, 1, 1], [], []>} : vector<112x32xbf16>, vector<32x128xbf16>, vector<112x128xf32> -> vector<112x128xf32>
    %c0_3 = arith.constant 0 : index
    %c0_4 = arith.constant 0 : index
    %3 = vector.load %arg3[%c0_3, %c0_4] : memref<1x128xf32, #tpu.memory_space<vmem>>, vector<1x128xf32>
    %4 = vector.broadcast %3 : vector<1x128xf32> to vector<112x128xf32>
    %5 = arith.addf %2, %4 : vector<112x128xf32>
    %cst_5 = arith.constant 0.000000e+00 : f32
    %6 = vector.broadcast %cst_5 : f32 to vector<112x128xf32>
    %7 = arith.maximumf %5, %6 : vector<112x128xf32>
    %8 = arith.truncf %7 : vector<112x128xf32> to vector<112x128xbf16>
    %c0_6 = arith.constant 0 : index
    %c0_7 = arith.constant 0 : index
    %9 = vector.load %arg4[%c0_6, %c0_7] : memref<128x128xbf16, #tpu.memory_space<vmem>>, vector<128x128xbf16>
    %cst_8 = arith.constant dense<0.000000e+00> : vector<112x128xf32>
    %10 = tpu.matmul %8, %9, %cst_8 {dimension_numbers = #tpu.dot_dimension_numbers<[1], [0], [0], [1], [0, 0, 1, 1], [], []>} : vector<112x128xbf16>, vector<128x128xbf16>, vector<112x128xf32> -> vector<112x128xf32>
    %c0_9 = arith.constant 0 : index
    %c0_10 = arith.constant 0 : index
    %11 = vector.load %arg5[%c0_9, %c0_10] : memref<1x128xf32, #tpu.memory_space<vmem>>, vector<1x128xf32>
    %12 = vector.broadcast %11 : vector<1x128xf32> to vector<112x128xf32>
    %13 = arith.addf %10, %12 : vector<112x128xf32>
    %cst_11 = arith.constant 0.000000e+00 : f32
    %14 = vector.broadcast %cst_11 : f32 to vector<112x128xf32>
    %15 = arith.maximumf %13, %14 : vector<112x128xf32>
    %16 = arith.truncf %15 : vector<112x128xf32> to vector<112x128xbf16>
    %c0_12 = arith.constant 0 : index
    %c0_13 = arith.constant 0 : index
    %17 = vector.load %arg6[%c0_12, %c0_13] : memref<128x128xbf16, #tpu.memory_space<vmem>>, vector<128x128xbf16>
    %cst_14 = arith.constant dense<0.000000e+00> : vector<112x128xf32>
    %18 = tpu.matmul %16, %17, %cst_14 {dimension_numbers = #tpu.dot_dimension_numbers<[1], [0], [0], [1], [0, 0, 1, 1], [], []>} : vector<112x128xbf16>, vector<128x128xbf16>, vector<112x128xf32> -> vector<112x128xf32>
    %c0_15 = arith.constant 0 : index
    %c0_16 = arith.constant 0 : index
    %19 = vector.load %arg7[%c0_15, %c0_16] : memref<1x128xf32, #tpu.memory_space<vmem>>, vector<1x128xf32>
    %20 = vector.broadcast %19 : vector<1x128xf32> to vector<112x128xf32>
    %21 = arith.addf %18, %20 : vector<112x128xf32>
    %cst_17 = arith.constant 0.000000e+00 : f32
    %22 = vector.broadcast %cst_17 : f32 to vector<112x128xf32>
    %23 = arith.maximumf %21, %22 : vector<112x128xf32>
    %c0_18 = arith.constant 0 : index
    %c0_19 = arith.constant 0 : index
    %24 = vector.load %arg8[%c0_18, %c0_19] : memref<112x128xf32, #tpu.memory_space<vmem>>, vector<112x128xf32>
    tpu.vector_store %arg8[%c0_18, %c0_19], %23 {strides = array<i32>} : memref<112x128xf32, #tpu.memory_space<vmem>>, vector<112x128xf32>,
    return
  }
  func.func @transform_0(%arg0: i32) -> (i32, i32) {
    %c0_i32 = arith.constant 0 : i32
    %c0_i32_0 = arith.constant 0 : i32
    return %arg0, %c0_i32 : i32, i32
  }
  func.func @transform_1(%arg0: i32) -> (i32, i32) {
    %c0_i32 = arith.constant 0 : i32
    %c0_i32_0 = arith.constant 0 : i32
    %c0_i32_1 = arith.constant 0 : i32
    return %c0_i32, %c0_i32_0 : i32, i32
  }
  func.func @transform_2(%arg0: i32) -> (i32, i32) {
    %c0_i32 = arith.constant 0 : i32
    %c0_i32_0 = arith.constant 0 : i32
    %c0_i32_1 = arith.constant 0 : i32
    return %c0_i32, %c0_i32_0 : i32, i32
  }
  func.func @transform_3(%arg0: i32) -> (i32, i32) {
    %c0_i32 = arith.constant 0 : i32
    %c0_i32_0 = arith.constant 0 : i32
    %c0_i32_1 = arith.constant 0 : i32
    return %c0_i32, %c0_i32_0 : i32, i32
  }
  func.func @transform_4(%arg0: i32) -> (i32, i32) {
    %c0_i32 = arith.constant 0 : i32
    %c0_i32_0 = arith.constant 0 : i32
    %c0_i32_1 = arith.constant 0 : i32
    return %c0_i32, %c0_i32_0 : i32, i32
  }
  func.func @transform_5(%arg0: i32) -> (i32, i32) {
    %c0_i32 = arith.constant 0 : i32
    %c0_i32_0 = arith.constant 0 : i32
    %c0_i32_1 = arith.constant 0 : i32
    return %c0_i32, %c0_i32_0 : i32, i32
  }
  func.func @transform_6(%arg0: i32) -> (i32, i32) {
    %c0_i32 = arith.constant 0 : i32
    %c0_i32_0 = arith.constant 0 : i32
    %c0_i32_1 = arith.constant 0 : i32
    return %c0_i32, %c0_i32_0 : i32, i32
  }
  func.func @transform_7(%arg0: i32) -> (i32, i32) {
    %c0_i32 = arith.constant 0 : i32
    %c0_i32_0 = arith.constant 0 : i32
    return %arg0, %c0_i32 : i32, i32
  }
}

</mosaic_0001>

<llo_original>
// kernel: tpu_custom_call.1
$region0: #{tpu_custom_call.1}
  #allocation0 [shape = 'u32[]', space=smem, size = 0x4, offset = 0x4, fixed_abs, tag = 'smem constant byte address 0x4 - core index']
  #allocation1 [shape = 'u32[144,128]{1,0:T(1,128)}', space=vmem, size = 0x12000, scoped, tag = 'internal scratch']
  %s0 = inlined_call_operand.hbm [shape: f32[8,128], index: 0, kind: input, shape index: {}]
  %s1 = inlined_call_operand.hbm [shape: f32[16,128], index: 1, kind: output, shape index: {}]
  %s2 = sld [smem:[#allocation0]]
  $region41: #{tpu_custom_call.1} parent=0
    _
  %s4 = ssub.s32 1, %s2
  %s5 = scalar_select 0, %s4, %s2
  $region1: #{tpu_custom_call.1} parent=0
    #allocation2 [shape = 'u8[4096]{0}', space=vmem, size = 0x1000, scoped, tag = 'input window, operand 0, single buffered']
    #allocation3 [shape = 's32[2]{0}', space=sflag, size = 0x8, scoped, tag = 'scoped memory for tpu_custom_call.1']
    #allocation4 [shape = 's32[2]{0}', space=sflag, size = 0x8, scoped, tag = 'scoped memory for tpu_custom_call.1']
    #allocation5 [shape = 'u8[8192]{0}', space=vmem, size = 0x2000, scoped, tag = 'output window, operand 0']
    %6 = vsyncpa [#allocation3], 0
    %7 = vsyncpa [#allocation4], 0
    %s8 = scalar_lea.sflag [#allocation4], 1
    %9 = vsyncpa %s8, 0
    loop: start=0, step=1, limit=4
    $region2: #{tpu_custom_call.1} parent=1 // loop_pre_header
      _
    $region3: #{tpu_custom_call.1} parent=1 // loop_header
      %s11 = sphi 0, %s15
      %p12 = scmp.ge.s32.totalorder %s11, 4
      %s19 = sphi 0, %s19
      %s21 = sphi 0, %s19
      %s22 = sphi 0, %s21
      %s36 = sphi 0, %s22
      %s42 = sphi 0, %s44
      %s45 = sphi 0, %s42
      %s46 = sphi 0, %s45
      %s62 = sphi 0, %s46
    $region4: #{tpu_custom_call.1} parent=1 // loop_header_branch
      %14 = sbr.rel (%p12) target = $region8
    $region5: #{tpu_custom_call.1} parent=1 // loop_body
      %s16 = ssub.s32 %s11, 1
      %s17 = ssub.s32 %s11, 2
      %s18 = sadd.s32 %s11, 1
      %s20 = sadd.s32 %s19, 1
      %p23 = scmp.eq.s32.totalorder %s11, 1
      %p24 = scmp.ne.s32.totalorder %s19, %s21
      %p25 = scmp.eq.s32.totalorder %s11, 0
      %p26 = por %p24, %p25
      %p27 = scmp.ne.s32.totalorder %s19, %s21
      %p28 = scmp.eq.s32.totalorder %s16, 1
      %p29 = por %p27, %p28
      %p30 = scmp.ne.s32.totalorder %s21, %s22
      %p31 = scmp.eq.s32.totalorder %s16, 0
      %p32 = por %p30, %p31
      %p33 = scmp.ne.s32.totalorder %s21, %s22
      %p34 = scmp.eq.s32.totalorder %s17, 1
      %p35 = por %p33, %p34
      %p37 = scmp.ne.s32.totalorder %s22, %s36
      %p38 = scmp.eq.s32.totalorder %s17, 0
      %p39 = por %p37, %p38
      %s40 = ssub.s32 %s11, %s18
      %p41 = scmp.eq.s32.totalorder %s40, 0
      %s43 = sadd.s32 %s42, 1
      %s44 = scalar_select %p41, %s42, %s43
      %p47 = pneg %p41
      %p48 = scmp.eq.s32.totalorder %s11, 1
      %p49 = por %p47, %p48
      %p50 = scmp.ne.s32.totalorder %s42, %s45
      %p51 = scmp.eq.s32.totalorder %s11, 0
      %p52 = por %p50, %p51
      %p53 = scmp.ne.s32.totalorder %s42, %s45
      %p54 = scmp.eq.s32.totalorder %s16, 1
      %p55 = por %p53, %p54
      %p56 = scmp.ne.s32.totalorder %s45, %s46
      %p57 = scmp.eq.s32.totalorder %s16, 0
      %p58 = por %p56, %p57
      %p59 = scmp.ne.s32.totalorder %s45, %s46
      %p60 = scmp.eq.s32.totalorder %s17, 1
      %p61 = por %p59, %p60
      %p63 = scmp.ne.s32.totalorder %s46, %s62
      %p64 = scmp.eq.s32.totalorder %s17, 0
      %p65 = por %p63, %p64
      %p66 = scmp.le.s32.totalorder 1, %s11
      %p67 = scmp.lt.s32.totalorder %s11, 3
      %p68 = pnand %p66, %p67
      %p69 = pneg %p68
      // Predicated region
      $region9: #{tpu_custom_call.1} parent=5 // pred_check
        _
      $region10: #{tpu_custom_call.1} parent=5 // pred_check_branch
        %71 = sbr.rel (%p68) target = $region12
      $region11: #{tpu_custom_call.1} parent=5 // pred_region
        %s72 = ssub.s32 %s11, 1
        // Predicated region
        $region13: #{tpu_custom_call.1} parent=11 // pred_check
          %p73 = pneg %p32
        $region14: #{tpu_custom_call.1} parent=11 // pred_check_branch
          %75 = sbr.rel (%p73) target = $region16
        $region15: #{tpu_custom_call.1} parent=11 // pred_region
          %s77 = ssub.s32 128, 128
          %78 = vsyncadd [#allocation3], %s77
          %s80 = sshll.u32 [#allocation2], 4
          %s81 = int_to_ptr.vmem [resolvable:$true] %s80
          %83 = dma.hbm_to_vmem [thread:$0]  %s0, 128, %s81, [#allocation3]
        $region16: #{tpu_custom_call.1} parent=11 // pred_fallthru
          _
      $region12: #{tpu_custom_call.1} parent=5 // pred_fallthru
        _
      %p84 = scmp.lt.s32.totalorder %s11, 2
      // Predicated region
      $region17: #{tpu_custom_call.1} parent=5 // pred_check
        %p85 = pneg %p84
      $region18: #{tpu_custom_call.1} parent=5 // pred_check_branch
        %87 = sbr.rel (%p85) target = $region20
      $region19: #{tpu_custom_call.1} parent=5 // pred_region
        _
      $region20: #{tpu_custom_call.1} parent=5 // pred_fallthru
        _
      %p88 = scmp.le.s32.totalorder 1, %s11
      %p89 = scmp.lt.s32.totalorder %s11, 3
      %p90 = pnand %p88, %p89
      %p91 = pneg %p90
      // Predicated region
      $region21: #{tpu_custom_call.1} parent=5 // pred_check
        _
      $region22: #{tpu_custom_call.1} parent=5 // pred_check_branch
        %93 = sbr.rel (%p90) target = $region24
      $region23: #{tpu_custom_call.1} parent=5 // pred_region
        %s94 = ssub.s32 %s11, 1
        // Predicated region
        $region25: #{tpu_custom_call.1} parent=23 // pred_check
          %p95 = pneg %p32
        $region26: #{tpu_custom_call.1} parent=23 // pred_check_branch
          %97 = sbr.rel (%p95) target = $region28
        $region27: #{tpu_custom_call.1} parent=23 // pred_region
          %98 = dma.done [#allocation3], 128
        $region28: #{tpu_custom_call.1} parent=23 // pred_fallthru
          _
        %p99 = pneg %p32
        %p100 = pneg %p29
        %p101 = pneg %p58
        %p102 = pneg %p55
        %s103 = sand.u32 %s45, 1
        %s104 = scalar_lea.sflag [#allocation4], %s103
        %s105 = sand.u32 %s45, 1
        %s106 = smul.addr %s105, 8
        %s107 = scalar_lea.vmem [#allocation5], %s106
        %v108 = vld [vmem:[#allocation2] sm:$0xff]
        %109 = vst [vmem:[%s107] sm:$0xff] %v108
        %s110 = sand.u32 %s45, 1
        %s111 = scalar_lea.sflag [#allocation4], %s110
        %s112 = sand.u32 %s45, 1
        %s113 = smul.addr %s112, 8
        %s114 = scalar_lea.vmem [#allocation5], %s113
        // Predicated region
        $region29: #{tpu_custom_call.1} parent=23 // pred_check
          %p115 = pneg %p55
        $region30: #{tpu_custom_call.1} parent=23 // pred_check_branch
          %117 = sbr.rel (%p115) target = $region32
        $region31: #{tpu_custom_call.1} parent=23 // pred_region
          %s119 = ssub.s32 128, 128
          %120 = vsyncadd %s111, %s119
          %s121 = smul.addr %s16, 128
          %s122 = scalar_lea.hbm %s1, %s121
          %s124 = sshll.u32 %s114, 4
          %s125 = int_to_ptr.vmem [resolvable:$true] %s124
          %127 = dma.vmem_to_hbm [thread:$0]  %s125, 128, %s122, %s111
        $region32: #{tpu_custom_call.1} parent=23 // pred_fallthru
          _
      $region24: #{tpu_custom_call.1} parent=5 // pred_fallthru
        _
      %p128 = scmp.le.s32.totalorder 2, %s11
      // Predicated region
      $region33: #{tpu_custom_call.1} parent=5 // pred_check
        %p129 = pneg %p128
      $region34: #{tpu_custom_call.1} parent=5 // pred_check_branch
        %131 = sbr.rel (%p129) target = $region36
      $region35: #{tpu_custom_call.1} parent=5 // pred_region
        %s132 = ssub.s32 %s11, 2
        // Predicated region
        $region37: #{tpu_custom_call.1} parent=35 // pred_check
          %p133 = pneg %p61
        $region38: #{tpu_custom_call.1} parent=35 // pred_check_branch
          %135 = sbr.rel (%p133) target = $region40
        $region39: #{tpu_custom_call.1} parent=35 // pred_region
          %s136 = sand.u32 %s46, 1
          %s137 = scalar_lea.sflag [#allocation4], %s136
          %s138 = sand.u32 %s46, 1
          %s139 = smul.addr %s138, 8
          %s140 = scalar_lea.vmem [#allocation5], %s139
          %141 = dma.done %s137, 128
        $region40: #{tpu_custom_call.1} parent=35 // pred_fallthru
          _
      $region36: #{tpu_custom_call.1} parent=5 // pred_fallthru
        _
    $region6: #{tpu_custom_call.1} parent=1 // loop_footer
      %s15 = sadd.s32 1, %s11
    $region7: #{tpu_custom_call.1} parent=1 // loop_footer_branch
      %10 = sbr.rel target = $region3
    $region8: #{tpu_custom_call.1} parent=1 // loop_exit
      _
    %142 = vsyncpa [#allocation3], 1
    %s143 = scalar_lea.sflag [#allocation3], 1
    %144 = vsyncpa %s143, 1
    %145 = vsyncpa [#allocation4], 1
    %s146 = scalar_lea.sflag [#allocation4], 1
    %147 = vsyncpa %s146, 1

// kernel: tpu_custom_call.1
$region0: #{tpu_custom_call.1}
  #allocation0 [shape = 'u32[]', space=smem, size = 0x4, offset = 0x4, fixed_abs, tag = 'smem constant byte address 0x4 - core index']
  #allocation1 [shape = 'u32[144,128]{1,0:T(1,128)}', space=vmem, size = 0x12000, scoped, tag = 'internal scratch']
  %s0 = inlined_call_operand.vmem [shape: bf16[224,32], index: 0, kind: input, shape index: {}]
  %s1 = inlined_call_operand.vmem [shape: bf16[32,128], index: 1, kind: input, shape index: {}]
  %s2 = inlined_call_operand.vmem [shape: f32[1,128], index: 2, kind: input, shape index: {}]
  %s3 = inlined_call_operand.vmem [shape: bf16[128,128], index: 3, kind: input, shape index: {}]
  %s4 = inlined_call_operand.vmem [shape: f32[1,128], index: 4, kind: input, shape index: {}]
  %s5 = inlined_call_operand.vmem [shape: bf16[128,128], index: 5, kind: input, shape index: {}]
  %s6 = inlined_call_operand.vmem [shape: f32[1,128], index: 6, kind: input, shape index: {}]
  %s7 = inlined_call_operand.hbm [shape: f32[224,128], index: 7, kind: output, shape index: {}]
  %s8 = sld [smem:[#allocation0]]
  $region61: #{tpu_custom_call.1} parent=0
    _
  %s10 = ssub.s32 1, %s8
  %s11 = scalar_select 0, %s10, %s8
  $region1: #{tpu_custom_call.1} parent=0
    #allocation2 [shape = 'u8[114688]{0}', space=vmem, size = 0x1c000, scoped, tag = 'output window, operand 0']
    #allocation3 [shape = 's32[2]{0}', space=sflag, size = 0x8, scoped, tag = 'scoped memory for tpu_custom_call.1']
    %12 = vsyncpa [#allocation3], 0
    %s13 = scalar_lea.sflag [#allocation3], 1
    %14 = vsyncpa %s13, 0
    loop: start=0, step=1, limit=4
    $region2: #{tpu_custom_call.1} parent=1 // loop_pre_header
      _
    $region3: #{tpu_custom_call.1} parent=1 // loop_header
      %s16 = sphi 0, %s20
      %p17 = scmp.ge.s32.totalorder %s16, 4
      %s26 = sphi 0, %s28
      %s29 = sphi 0, %s26
      %s30 = sphi 0, %s29
      %s46 = sphi 0, %s30
      %s50 = sphi 0, %s50
      %s52 = sphi 0, %s50
      %s53 = sphi 0, %s52
      %s67 = sphi 0, %s53
      %s71 = sphi 0, %s71
      %s73 = sphi 0, %s71
      %s74 = sphi 0, %s73
      %s88 = sphi 0, %s74
      %s92 = sphi 0, %s92
      %s94 = sphi 0, %s92
      %s95 = sphi 0, %s94
      %s109 = sphi 0, %s95
      %s113 = sphi 0, %s113
      %s115 = sphi 0, %s113
      %s116 = sphi 0, %s115
      %s130 = sphi 0, %s116
      %s134 = sphi 0, %s134
      %s136 = sphi 0, %s134
      %s137 = sphi 0, %s136
      %s151 = sphi 0, %s137
      %s155 = sphi 0, %s155
      %s157 = sphi 0, %s155
      %s158 = sphi 0, %s157
      %s172 = sphi 0, %s158
      %s178 = sphi 0, %s180
      %s181 = sphi 0, %s178
      %s182 = sphi 0, %s181
      %s198 = sphi 0, %s182
    $region4: #{tpu_custom_call.1} parent=1 // loop_header_branch
      %19 = sbr.rel (%p17) target = $region8
    $region5: #{tpu_custom_call.1} parent=1 // loop_body
      %s21 = ssub.s32 %s16, 1
      %s22 = ssub.s32 %s16, 2
      %s23 = sadd.s32 %s16, 1
      %s24 = ssub.s32 %s16, %s23
      %p25 = scmp.eq.s32.totalorder %s24, 0
      %s27 = sadd.s32 %s26, 1
      %s28 = scalar_select %p25, %s26, %s27
      %p31 = pneg %p25
      %p32 = scmp.eq.s32.totalorder %s16, 1
      %p33 = por %p31, %p32
      %p34 = scmp.ne.s32.totalorder %s26, %s29
      %p35 = scmp.eq.s32.totalorder %s16, 0
      %p36 = por %p34, %p35
      %p37 = scmp.ne.s32.totalorder %s26, %s29
      %p38 = scmp.eq.s32.totalorder %s21, 1
      %p39 = por %p37, %p38
      %p40 = scmp.ne.s32.totalorder %s29, %s30
      %p41 = scmp.eq.s32.totalorder %s21, 0
      %p42 = por %p40, %p41
      %p43 = scmp.ne.s32.totalorder %s29, %s30
      %p44 = scmp.eq.s32.totalorder %s22, 1
      %p45 = por %p43, %p44
      %p47 = scmp.ne.s32.totalorder %s30, %s46
      %p48 = scmp.eq.s32.totalorder %s22, 0
      %p49 = por %p47, %p48
      %s51 = sadd.s32 %s50, 1
      %p54 = scmp.eq.s32.totalorder %s16, 1
      %p55 = scmp.ne.s32.totalorder %s50, %s52
      %p56 = scmp.eq.s32.totalorder %s16, 0
      %p57 = por %p55, %p56
      %p58 = scmp.ne.s32.totalorder %s50, %s52
      %p59 = scmp.eq.s32.totalorder %s21, 1
      %p60 = por %p58, %p59
      %p61 = scmp.ne.s32.totalorder %s52, %s53
      %p62 = scmp.eq.s32.totalorder %s21, 0
      %p63 = por %p61, %p62
      %p64 = scmp.ne.s32.totalorder %s52, %s53
      %p65 = scmp.eq.s32.totalorder %s22, 1
      %p66 = por %p64, %p65
      %p68 = scmp.ne.s32.totalorder %s53, %s67
      %p69 = scmp.eq.s32.totalorder %s22, 0
      %p70 = por %p68, %p69
      %s72 = sadd.s32 %s71, 1
      %p75 = scmp.eq.s32.totalorder %s16, 1
      %p76 = scmp.ne.s32.totalorder %s71, %s73
      %p77 = scmp.eq.s32.totalorder %s16, 0
      %p78 = por %p76, %p77
      %p79 = scmp.ne.s32.totalorder %s71, %s73
      %p80 = scmp.eq.s32.totalorder %s21, 1
      %p81 = por %p79, %p80
      %p82 = scmp.ne.s32.totalorder %s73, %s74
      %p83 = scmp.eq.s32.totalorder %s21, 0
      %p84 = por %p82, %p83
      %p85 = scmp.ne.s32.totalorder %s73, %s74
      %p86 = scmp.eq.s32.totalorder %s22, 1
      %p87 = por %p85, %p86
      %p89 = scmp.ne.s32.totalorder %s74, %s88
      %p90 = scmp.eq.s32.totalorder %s22, 0
      %p91 = por %p89, %p90
      %s93 = sadd.s32 %s92, 1
      %p96 = scmp.eq.s32.totalorder %s16, 1
      %p97 = scmp.ne.s32.totalorder %s92, %s94
      %p98 = scmp.eq.s32.totalorder %s16, 0
      %p99 = por %p97, %p98
      %p100 = scmp.ne.s32.totalorder %s92, %s94
      %p101 = scmp.eq.s32.totalorder %s21, 1
      %p102 = por %p100, %p101
      %p103 = scmp.ne.s32.totalorder %s94, %s95
      %p104 = scmp.eq.s32.totalorder %s21, 0
      %p105 = por %p103, %p104
      %p106 = scmp.ne.s32.totalorder %s94, %s95
      %p107 = scmp.eq.s32.totalorder %s22, 1
      %p108 = por %p106, %p107
      %p110 = scmp.ne.s32.totalorder %s95, %s109
      %p111 = scmp.eq.s32.totalorder %s22, 0
      %p112 = por %p110, %p111
      %s114 = sadd.s32 %s113, 1
      %p117 = scmp.eq.s32.totalorder %s16, 1
      %p118 = scmp.ne.s32.totalorder %s113, %s115
      %p119 = scmp.eq.s32.totalorder %s16, 0
      %p120 = por %p118, %p119
      %p121 = scmp.ne.s32.totalorder %s113, %s115
      %p122 = scmp.eq.s32.totalorder %s21, 1
      %p123 = por %p121, %p122
      %p124 = scmp.ne.s32.totalorder %s115, %s116
      %p125 = scmp.eq.s32.totalorder %s21, 0
      %p126 = por %p124, %p125
      %p127 = scmp.ne.s32.totalorder %s115, %s116
      %p128 = scmp.eq.s32.totalorder %s22, 1
      %p129 = por %p127, %p128
      %p131 = scmp.ne.s32.totalorder %s116, %s130
      %p132 = scmp.eq.s32.totalorder %s22, 0
      %p133 = por %p131, %p132
      %s135 = sadd.s32 %s134, 1
      %p138 = scmp.eq.s32.totalorder %s16, 1
      %p139 = scmp.ne.s32.totalorder %s134, %s136
      %p140 = scmp.eq.s32.totalorder %s16, 0
      %p141 = por %p139, %p140
      %p142 = scmp.ne.s32.totalorder %s134, %s136
      %p143 = scmp.eq.s32.totalorder %s21, 1
      %p144 = por %p142, %p143
      %p145 = scmp.ne.s32.totalorder %s136, %s137
      %p146 = scmp.eq.s32.totalorder %s21, 0
      %p147 = por %p145, %p146
      %p148 = scmp.ne.s32.totalorder %s136, %s137
      %p149 = scmp.eq.s32.totalorder %s22, 1
      %p150 = por %p148, %p149
      %p152 = scmp.ne.s32.totalorder %s137, %s151
      %p153 = scmp.eq.s32.totalorder %s22, 0
      %p154 = por %p152, %p153
      %s156 = sadd.s32 %s155, 1
      %p159 = scmp.eq.s32.totalorder %s16, 1
      %p160 = scmp.ne.s32.totalorder %s155, %s157
      %p161 = scmp.eq.s32.totalorder %s16, 0
      %p162 = por %p160, %p161
      %p163 = scmp.ne.s32.totalorder %s155, %s157
      %p164 = scmp.eq.s32.totalorder %s21, 1
      %p165 = por %p163, %p164
      %p166 = scmp.ne.s32.totalorder %s157, %s158
      %p167 = scmp.eq.s32.totalorder %s21, 0
      %p168 = por %p166, %p167
      %p169 = scmp.ne.s32.totalorder %s157, %s158
      %p170 = scmp.eq.s32.totalorder %s22, 1
      %p171 = por %p169, %p170
      %p173 = scmp.ne.s32.totalorder %s158, %s172
      %p174 = scmp.eq.s32.totalorder %s22, 0
      %p175 = por %p173, %p174
      %s176 = ssub.s32 %s16, %s23
      %p177 = scmp.eq.s32.totalorder %s176, 0
      %s179 = sadd.s32 %s178, 1
      %s180 = scalar_select %p177, %s178, %s179
      %p183 = pneg %p177
      %p184 = scmp.eq.s32.totalorder %s16, 1
      %p185 = por %p183, %p184
      %p186 = scmp.ne.s32.totalorder %s178, %s181
      %p187 = scmp.eq.s32.totalorder %s16, 0
      %p188 = por %p186, %p187
      %p189 = scmp.ne.s32.totalorder %s178, %s181
      %p190 = scmp.eq.s32.totalorder %s21, 1
      %p191 = por %p189, %p190
      %p192 = scmp.ne.s32.totalorder %s181, %s182
      %p193 = scmp.eq.s32.totalorder %s21, 0
      %p194 = por %p192, %p193
      %p195 = scmp.ne.s32.totalorder %s181, %s182
      %p196 = scmp.eq.s32.totalorder %s22, 1
      %p197 = por %p195, %p196
      %p199 = scmp.ne.s32.totalorder %s182, %s198
      %p200 = scmp.eq.s32.totalorder %s22, 0
      %p201 = por %p199, %p200
      %p202 = scmp.le.s32.totalorder 1, %s16
      %p203 = scmp.lt.s32.totalorder %s16, 3
      %p204 = pnand %p202, %p203
      %p205 = pneg %p204
      // Predicated region
      $region9: #{tpu_custom_call.1} parent=5 // pred_check
        _
      $region10: #{tpu_custom_call.1} parent=5 // pred_check_branch
        %207 = sbr.rel (%p204) target = $region12
      $region11: #{tpu_custom_call.1} parent=5 // pred_region
        %s208 = ssub.s32 %s16, 1
        // Predicated region
        $region13: #{tpu_custom_call.1} parent=11 // pred_check
          %p209 = pneg %p63
        $region14: #{tpu_custom_call.1} parent=11 // pred_check_branch
          %211 = sbr.rel (%p209) target = $region16
        $region15: #{tpu_custom_call.1} parent=11 // pred_region
          _
        $region16: #{tpu_custom_call.1} parent=11 // pred_fallthru
          _
        // Predicated region
        $region17: #{tpu_custom_call.1} parent=11 // pred_check
          %p212 = pneg %p84
        $region18: #{tpu_custom_call.1} parent=11 // pred_check_branch
          %214 = sbr.rel (%p212) target = $region20
        $region19: #{tpu_custom_call.1} parent=11 // pred_region
          _
        $region20: #{tpu_custom_call.1} parent=11 // pred_fallthru
          _
        // Predicated region
        $region21: #{tpu_custom_call.1} parent=11 // pred_check
          %p215 = pneg %p105
        $region22: #{tpu_custom_call.1} parent=11 // pred_check_branch
          %217 = sbr.rel (%p215) target = $region24
        $region23: #{tpu_custom_call.1} parent=11 // pred_region
          _
        $region24: #{tpu_custom_call.1} parent=11 // pred_fallthru
          _
        // Predicated region
        $region25: #{tpu_custom_call.1} parent=11 // pred_check
          %p218 = pneg %p126
        $region26: #{tpu_custom_call.1} parent=11 // pred_check_branch
          %220 = sbr.rel (%p218) target = $region28
        $region27: #{tpu_custom_call.1} parent=11 // pred_region
          _
        $region28: #{tpu_custom_call.1} parent=11 // pred_fallthru
          _
        // Predicated region
        $region29: #{tpu_custom_call.1} parent=11 // pred_check
          %p221 = pneg %p147
        $region30: #{tpu_custom_call.1} parent=11 // pred_check_branch
          %223 = sbr.rel (%p221) target = $region32
        $region31: #{tpu_custom_call.1} parent=11 // pred_region
          _
        $region32: #{tpu_custom_call.1} parent=11 // pred_fallthru
          _
        // Predicated region
        $region33: #{tpu_custom_call.1} parent=11 // pred_check
          %p224 = pneg %p168
        $region34: #{tpu_custom_call.1} parent=11 // pred_check_branch
          %226 = sbr.rel (%p224) target = $region36
        $region35: #{tpu_custom_call.1} parent=11 // pred_region
          _
        $region36: #{tpu_custom_call.1} parent=11 // pred_fallthru
          _
      $region12: #{tpu_custom_call.1} parent=5 // pred_fallthru
        _
      %p227 = scmp.lt.s32.totalorder %s16, 2
      // Predicated region
      $region37: #{tpu_custom_call.1} parent=5 // pred_check
        %p228 = pneg %p227
      $region38: #{tpu_custom_call.1} parent=5 // pred_check_branch
        %230 = sbr.rel (%p228) target = $region40
      $region39: #{tpu_custom_call.1} parent=5 // pred_region
        // Predicated region
        $region41: #{tpu_custom_call.1} parent=39 // pred_check
          %p231 = pneg %p36
        $region42: #{tpu_custom_call.1} parent=39 // pred_check_branch
          %233 = sbr.rel (%p231) target = $region44
        $region43: #{tpu_custom_call.1} parent=39 // pred_region
          %s234 = smul.u32 14, %s16
          %p235 = scmp.lt.s32.totalorder %s234, 27
          %s236 = scalar_select %p235, %s234, 27
          %s237 = smul.addr %s236, 4
          %s238 = scalar_lea.vmem %s0, %s237
          %s239 = smul.u32 14, %s16
        $region44: #{tpu_custom_call.1} parent=39 // pred_fallthru
          _
      $region40: #{tpu_custom_call.1} parent=5 // pred_fallthru
        _
      %p240 = scmp.le.s32.totalorder 1, %s16
      %p241 = scmp.lt.s32.totalorder %s16, 3
      %p242 = pnand %p240, %p241
      %p243 = pneg %p242
      // Predicated region
      $region45: #{tpu_custom_call.1} parent=5 // pred_check
        _
      $region46: #{tpu_custom_call.1} parent=5 // pred_check_branch
        %245 = sbr.rel (%p242) target = $region48
      $region47: #{tpu_custom_call.1} parent=5 // pred_region
        %s246 = ssub.s32 %s16, 1
        %s247 = smul.u32 14, %s21
        %p248 = scmp.lt.s32.totalorder %s247, 27
        %s249 = scalar_select %p248, %s247, 27
        %s250 = smul.addr %s249, 4
        %s251 = scalar_lea.vmem %s0, %s250
        %p252 = pneg %p42
        %p253 = pneg %p39
        %p254 = pneg %p63
        %p255 = pneg %p60
        %p256 = pneg %p84
        %p257 = pneg %p81
        %p258 = pneg %p105
        %p259 = pneg %p102
        %p260 = pneg %p126
        %p261 = pneg %p123
        %p262 = pneg %p147
        %p263 = pneg %p144
        %p264 = pneg %p168
        %p265 = pneg %p165
        %p266 = pneg %p194
        %p267 = pneg %p191
        %s268 = sand.u32 %s181, 1
        %s269 = scalar_lea.sflag [#allocation3], %s268
        %s270 = sand.u32 %s181, 1
        %s271 = smul.addr %s270, 112
        %s272 = scalar_lea.vmem [#allocation2], %s271
        %s273 = smul.u32 14, %s21
        %p274 = scmp.lt.s32.totalorder %s273, 27
        %s275 = scalar_select %p274, %s273, 27
        %s276 = smul.addr %s275, 4
        %s277 = scalar_lea.vmem %s0, %s276
        %s278 = smul.u32 14, %s21
        %s279 = smul.u32 14, %s21
        %v281 = vld [vmem:[%s277] sm:$0xf]
        %v282 = vld [vmem:[%s277 + $0x4] sm:$0xf]
        %v283 = vld [vmem:[%s277 + $0x8] sm:$0xf]
        %v284 = vld [vmem:[%s277 + $0xc] sm:$0xf]
        %v285 = vld [vmem:[%s277 + $0x10] sm:$0xf]
        %v286 = vld [vmem:[%s277 + $0x14] sm:$0xf]
        %v287 = vld [vmem:[%s277 + $0x18] sm:$0xf]
        %v288 = vld [vmem:[%s277 + $0x1c] sm:$0xf]
        %v289 = vld [vmem:[%s277 + $0x20] sm:$0xf]
        %v290 = vld [vmem:[%s277 + $0x24] sm:$0xf]
        %v291 = vld [vmem:[%s277 + $0x28] sm:$0xf]
        %v292 = vld [vmem:[%s277 + $0x2c] sm:$0xf]
        %v293 = vld [vmem:[%s277 + $0x30] sm:$0xf]
        %v294 = vld [vmem:[%s277 + $0x34] sm:$0xf]
        %v295 = vld [vmem:[%s1] sm:$0xf]
        %v296 = vld [vmem:[%s1 + $0x4] sm:$0xf]
        %v297 = vld [vmem:[%s1 + $0x8] sm:$0xf]
        %v298 = vld [vmem:[%s1 + $0xc] sm:$0xf]
        %v299 = vld [vmem:[%s2] sm:$0x1]
        %v301 = vlaneseq
        %v302 = vshrl.u32 %v301, 7
        %v303 = vsub.s32 0, %v302
        %v304 = vrot.slane %v299, %v303
        %v320 = vunpack.c.l.b16 %v281
        %v321 = vunpack.c.l.b16 %v282
        %v322 = vunpack.c.l.b16 %v283
        %v323 = vunpack.c.l.b16 %v284
        %v324 = vunpack.c.l.b16 %v285
        %v325 = vunpack.c.l.b16 %v286
        %v326 = vunpack.c.l.b16 %v287
        %v327 = vunpack.c.l.b16 %v288
        %v328 = vunpack.c.l.b16 %v289
        %v329 = vunpack.c.l.b16 %v290
        %v330 = vunpack.c.l.b16 %v291
        %v331 = vunpack.c.l.b16 %v292
        %v332 = vunpack.c.l.b16 %v293
        %v333 = vunpack.c.l.b16 %v294
        %v334 = vpack.c.b16 %v321, %v320
        %v335 = vpack.c.b16 %v323, %v322
        %v336 = vpack.c.b16 %v325, %v324
        %v337 = vpack.c.b16 %v327, %v326
        %v338 = vpack.c.b16 %v329, %v328
        %v339 = vpack.c.b16 %v331, %v330
        %v340 = vpack.c.b16 %v333, %v332
        %v345 = vunpack.c.l.b16 %v295
        %v346 = vunpack.c.l.b16 %v296
        %v347 = vunpack.c.l.b16 %v297
        %v348 = vunpack.c.l.b16 %v298
        %v349 = vpack.c.b16 %v346, %v345
        %v350 = vpack.c.b16 %v348, %v347
        %vm353 = vcmask 261120
        %v355 = vsel %vm353, %v334, 0
        %v358 = vsel %vm353, %v335, 0
        %v361 = vsel %vm353, %v336, 0
        %v364 = vsel %vm353, %v337, 0
        %v367 = vsel %vm353, %v338, 0
        %v370 = vsel %vm353, %v339, 0
        %v373 = vsel %vm353, %v340, 0
        %375 = vmatprep.subr.bf16.mxu0 0
        %376 = vmatpush1.bf16.msra.mxu0 0
        %377 = vmatprep.subr.bf16.mxu0 0
        %378 = vmatpush1.bf16.msra.mxu0 0
        %379 = vmatprep.subr.bf16.mxu0 0
        %380 = vmatpush1.bf16.msra.mxu0 0
        %381 = vmatprep.subr.bf16.mxu0 0
        %382 = vmatpush1.bf16.msra.mxu0 0
        %383 = vmatprep.subr.bf16.mxu0 0
        %384 = vmatpush1.bf16.msra.mxu0 0
        %385 = vmatprep.subr.bf16.mxu0 0
        %386 = vmatpush1.bf16.msra.mxu0 0
        %387 = vmatprep.subr.bf16.mxu0 0
        %388 = vmatpush1.bf16.msra.mxu0 %v350
        %389 = vmatprep.subr.bf16.mxu0 0
        %390 = vmatpush1.bf16.msra.mxu0 %v349
        %391 = vmatprep.subr.bf16.mxu0 0
        %392 = vmatpush2.bf16.msra.mxu0 0
        %393 = vmatprep.subr.bf16.mxu0 0
        %394 = vmatpush2.bf16.msra.mxu0 0
        %395 = vmatprep.subr.bf16.mxu0 0
        %396 = vmatpush2.bf16.msra.mxu0 0
        %397 = vmatprep.subr.bf16.mxu0 0
        %398 = vmatpush2.bf16.msra.mxu0 0
        %399 = vmatprep.subr.bf16.mxu0 0
        %400 = vmatpush2.bf16.msra.mxu0 0
        %401 = vmatprep.subr.bf16.mxu0 0
        %402 = vmatpush2.bf16.msra.mxu0 0
        %403 = vmatprep.subr.bf16.mxu0 0
        %404 = vmatpush2.bf16.msra.mxu0 0
        %405 = vmatprep.subr.bf16.mxu0 0
        %406 = vmatpush2.bf16.msra.mxu0 0
        %407 = vmatprep.mubr.bf16.mxu0 0
        %408 = vmatmul.mubr.bf16.gmra.mxu0 %v355
        %v409 = vpop.f32.mrf.mxu0
        %v410 = vadd.f32 %v304, %v409
        %v411 = vpop.f32.mrf.mxu0
        %v412 = vpop.f32.mrf.mxu0
        %v413 = vadd.f32 %v304, %v412
        %v414 = vpop.f32.mrf.mxu0
        %415 = vmatprep.mubr.bf16.mxu0 0
        %416 = vmatmul.mubr.bf16.gmra.mxu0 %v358
        %v417 = vpop.f32.mrf.mxu0
        %v418 = vadd.f32 %v304, %v417
        %v419 = vpop.f32.mrf.mxu0
        %v420 = vpop.f32.mrf.mxu0
        %v421 = vadd.f32 %v304, %v420
        %v422 = vpop.f32.mrf.mxu0
        %423 = vmatprep.mubr.bf16.mxu0 0
        %424 = vmatmul.mubr.bf16.gmra.mxu0 %v361
        %v425 = vpop.f32.mrf.mxu0
        %v426 = vadd.f32 %v304, %v425
        %v427 = vpop.f32.mrf.mxu0
        %v428 = vpop.f32.mrf.mxu0
        %v429 = vadd.f32 %v304, %v428
        %v430 = vpop.f32.mrf.mxu0
        %431 = vmatprep.mubr.bf16.mxu0 0
        %432 = vmatmul.mubr.bf16.gmra.mxu0 %v364
        %v433 = vpop.f32.mrf.mxu0
        %v434 = vadd.f32 %v304, %v433
        %v435 = vpop.f32.mrf.mxu0
        %v436 = vpop.f32.mrf.mxu0
        %v437 = vadd.f32 %v304, %v436
        %v438 = vpop.f32.mrf.mxu0
        %439 = vmatprep.mubr.bf16.mxu0 0
        %440 = vmatmul.mubr.bf16.gmra.mxu0 %v367
        %v441 = vpop.f32.mrf.mxu0
        %v442 = vadd.f32 %v304, %v441
        %v443 = vpop.f32.mrf.mxu0
        %v444 = vpop.f32.mrf.mxu0
        %v445 = vadd.f32 %v304, %v444
        %v446 = vpop.f32.mrf.mxu0
        %447 = vmatprep.mubr.bf16.mxu0 0
        %448 = vmatmul.mubr.bf16.gmra.mxu0 %v370
        %v449 = vpop.f32.mrf.mxu0
        %v450 = vadd.f32 %v304, %v449
        %v451 = vpop.f32.mrf.mxu0
        %v452 = vpop.f32.mrf.mxu0
        %v453 = vadd.f32 %v304, %v452
        %v454 = vpop.f32.mrf.mxu0
        %455 = vmatprep.mubr.bf16.mxu0 0
        %456 = vmatmul.mubr.bf16.gmra.mxu0 %v373
        %v457 = vpop.f32.mrf.mxu0
        %v458 = vadd.f32 %v304, %v457
        %v459 = vpop.f32.mrf.mxu0
        %v460 = vpop.f32.mrf.mxu0
        %v461 = vadd.f32 %v304, %v460
        %v462 = vpop.f32.mrf.mxu0
        %463 = vdwg.mxu0
        %v464 = vmax.f32 %v410, 0.0
        %v465 = vmax.f32 %v413, 0.0
        %v466 = vmax.f32 %v418, 0.0
        %v467 = vmax.f32 %v421, 0.0
        %v468 = vmax.f32 %v426, 0.0
        %v469 = vmax.f32 %v429, 0.0
        %v470 = vmax.f32 %v434, 0.0
        %v471 = vmax.f32 %v437, 0.0
        %v472 = vmax.f32 %v442, 0.0
        %v473 = vmax.f32 %v445, 0.0
        %v474 = vmax.f32 %v450, 0.0
        %v475 = vmax.f32 %v453, 0.0
        %v476 = vmax.f32 %v458, 0.0
        %v477 = vmax.f32 %v461, 0.0
        %v478 = vpack.c.bf16 %v465, %v464
        %v479 = vpack.c.bf16 %v467, %v466
        %v480 = vpack.c.bf16 %v469, %v468
        %v481 = vpack.c.bf16 %v471, %v470
        %v482 = vpack.c.bf16 %v473, %v472
        %v483 = vpack.c.bf16 %v475, %v474
        %v484 = vpack.c.bf16 %v477, %v476
        %v485 = vld [vmem:[%s3] sm:$0xf]
        %v486 = vld [vmem:[%s3 + $0x4] sm:$0xf]
        %v487 = vld [vmem:[%s3 + $0x8] sm:$0xf]
        %v488 = vld [vmem:[%s3 + $0xc] sm:$0xf]
        %v489 = vld [vmem:[%s3 + $0x10] sm:$0xf]
        %v490 = vld [vmem:[%s3 + $0x14] sm:$0xf]
        %v491 = vld [vmem:[%s3 + $0x18] sm:$0xf]
        %v492 = vld [vmem:[%s3 + $0x1c] sm:$0xf]
        %v493 = vld [vmem:[%s3 + $0x20] sm:$0xf]
        %v494 = vld [vmem:[%s3 + $0x24] sm:$0xf]
        %v495 = vld [vmem:[%s3 + $0x28] sm:$0xf]
        %v496 = vld [vmem:[%s3 + $0x2c] sm:$0xf]
        %v497 = vld [vmem:[%s3 + $0x30] sm:$0xf]
        %v498 = vld [vmem:[%s3 + $0x34] sm:$0xf]
        %v499 = vld [vmem:[%s3 + $0x38] sm:$0xf]
        %v500 = vld [vmem:[%s3 + $0x3c] sm:$0xf]
        %v501 = vld [vmem:[%s4] sm:$0x1]
        %v503 = vlaneseq
        %v504 = vshrl.u32 %v503, 7
        %v505 = vsub.s32 0, %v504
        %v506 = vrot.slane %v501, %v505
        %v524 = vunpack.c.l.b16 %v485
        %v525 = vunpack.c.l.b16 %v486
        %v526 = vunpack.c.l.b16 %v487
        %v527 = vunpack.c.l.b16 %v488
        %v528 = vunpack.c.l.b16 %v489
        %v529 = vunpack.c.l.b16 %v490
        %v530 = vunpack.c.l.b16 %v491
        %v531 = vunpack.c.l.b16 %v492
        %v532 = vunpack.c.l.b16 %v493
        %v533 = vunpack.c.l.b16 %v494
        %v534 = vunpack.c.l.b16 %v495
        %v535 = vunpack.c.l.b16 %v496
        %v536 = vunpack.c.l.b16 %v497
        %v537 = vunpack.c.l.b16 %v498
        %v538 = vunpack.c.l.b16 %v499
        %v539 = vunpack.c.l.b16 %v500
        %v540 = vpack.c.b16 %v525, %v524
        %v541 = vpack.c.b16 %v527, %v526
        %v542 = vpack.c.b16 %v529, %v528
        %v543 = vpack.c.b16 %v531, %v530
        %v544 = vpack.c.b16 %v533, %v532
        %v545 = vpack.c.b16 %v535, %v534
        %v546 = vpack.c.b16 %v537, %v536
        %v547 = vpack.c.b16 %v539, %v538
        %556 = vmatprep.subr.bf16.mxu0 0
        %557 = vmatpush1.bf16.msra.mxu0 %v547
        %558 = vmatprep.subr.bf16.mxu0 0
        %559 = vmatpush1.bf16.msra.mxu0 %v546
        %560 = vmatprep.subr.bf16.mxu0 0
        %561 = vmatpush1.bf16.msra.mxu0 %v545
        %562 = vmatprep.subr.bf16.mxu0 0
        %563 = vmatpush1.bf16.msra.mxu0 %v544
        %564 = vmatprep.subr.bf16.mxu0 0
        %565 = vmatpush1.bf16.msra.mxu0 %v543
        %566 = vmatprep.subr.bf16.mxu0 0
        %567 = vmatpush1.bf16.msra.mxu0 %v542
        %568 = vmatprep.subr.bf16.mxu0 0
        %569 = vmatpush1.bf16.msra.mxu0 %v541
        %570 = vmatprep.subr.bf16.mxu0 0
        %571 = vmatpush1.bf16.msra.mxu0 %v540
        %572 = vmatprep.subr.bf16.mxu0 0
        %573 = vmatpush2.bf16.msra.mxu0 0
        %574 = vmatprep.subr.bf16.mxu0 0
        %575 = vmatpush2.bf16.msra.mxu0 0
        %576 = vmatprep.subr.bf16.mxu0 0
        %577 = vmatpush2.bf16.msra.mxu0 0
        %578 = vmatprep.subr.bf16.mxu0 0
        %579 = vmatpush2.bf16.msra.mxu0 0
        %580 = vmatprep.subr.bf16.mxu0 0
        %581 = vmatpush2.bf16.msra.mxu0 0
        %582 = vmatprep.subr.bf16.mxu0 0
        %583 = vmatpush2.bf16.msra.mxu0 0
        %584 = vmatprep.subr.bf16.mxu0 0
        %585 = vmatpush2.bf16.msra.mxu0 0
        %586 = vmatprep.subr.bf16.mxu0 0
        %587 = vmatpush2.bf16.msra.mxu0 0
        %588 = vmatprep.mubr.bf16.mxu0 0
        %589 = vmatmul.mubr.bf16.gmra.mxu0 %v478
        %v590 = vpop.f32.mrf.mxu0
        %v591 = vadd.f32 %v506, %v590
        %v592 = vpop.f32.mrf.mxu0
        %v593 = vpop.f32.mrf.mxu0
        %v594 = vadd.f32 %v506, %v593
        %v595 = vpop.f32.mrf.mxu0
        %596 = vmatprep.mubr.bf16.mxu0 0
        %597 = vmatmul.mubr.bf16.gmra.mxu0 %v479
        %v598 = vpop.f32.mrf.mxu0
        %v599 = vadd.f32 %v506, %v598
        %v600 = vpop.f32.mrf.mxu0
        %v601 = vpop.f32.mrf.mxu0
        %v602 = vadd.f32 %v506, %v601
        %v603 = vpop.f32.mrf.mxu0
        %604 = vmatprep.mubr.bf16.mxu0 0
        %605 = vmatmul.mubr.bf16.gmra.mxu0 %v480
        %v606 = vpop.f32.mrf.mxu0
        %v607 = vadd.f32 %v506, %v606
        %v608 = vpop.f32.mrf.mxu0
        %v609 = vpop.f32.mrf.mxu0
        %v610 = vadd.f32 %v506, %v609
        %v611 = vpop.f32.mrf.mxu0
        %612 = vmatprep.mubr.bf16.mxu0 0
        %613 = vmatmul.mubr.bf16.gmra.mxu0 %v481
        %v614 = vpop.f32.mrf.mxu0
        %v615 = vadd.f32 %v506, %v614
        %v616 = vpop.f32.mrf.mxu0
        %v617 = vpop.f32.mrf.mxu0
        %v618 = vadd.f32 %v506, %v617
        %v619 = vpop.f32.mrf.mxu0
        %620 = vmatprep.mubr.bf16.mxu0 0
        %621 = vmatmul.mubr.bf16.gmra.mxu0 %v482
        %v622 = vpop.f32.mrf.mxu0
        %v623 = vadd.f32 %v506, %v622
        %v624 = vpop.f32.mrf.mxu0
        %v625 = vpop.f32.mrf.mxu0
        %v626 = vadd.f32 %v506, %v625
        %v627 = vpop.f32.mrf.mxu0
        %628 = vmatprep.mubr.bf16.mxu0 0
        %629 = vmatmul.mubr.bf16.gmra.mxu0 %v483
        %v630 = vpop.f32.mrf.mxu0
        %v631 = vadd.f32 %v506, %v630
        %v632 = vpop.f32.mrf.mxu0
        %v633 = vpop.f32.mrf.mxu0
        %v634 = vadd.f32 %v506, %v633
        %v635 = vpop.f32.mrf.mxu0
        %636 = vmatprep.mubr.bf16.mxu0 0
        %637 = vmatmul.mubr.bf16.gmra.mxu0 %v484
        %v638 = vpop.f32.mrf.mxu0
        %v639 = vadd.f32 %v506, %v638
        %v640 = vpop.f32.mrf.mxu0
        %v641 = vpop.f32.mrf.mxu0
        %v642 = vadd.f32 %v506, %v641
        %v643 = vpop.f32.mrf.mxu0
        %644 = vdwg.mxu0
        %v645 = vmax.f32 %v591, 0.0
        %v646 = vmax.f32 %v594, 0.0
        %v647 = vmax.f32 %v599, 0.0
        %v648 = vmax.f32 %v602, 0.0
        %v649 = vmax.f32 %v607, 0.0
        %v650 = vmax.f32 %v610, 0.0
        %v651 = vmax.f32 %v615, 0.0
        %v652 = vmax.f32 %v618, 0.0
        %v653 = vmax.f32 %v623, 0.0
        %v654 = vmax.f32 %v626, 0.0
        %v655 = vmax.f32 %v631, 0.0
        %v656 = vmax.f32 %v634, 0.0
        %v657 = vmax.f32 %v639, 0.0
        %v658 = vmax.f32 %v642, 0.0
        %v659 = vpack.c.bf16 %v646, %v645
        %v660 = vpack.c.bf16 %v648, %v647
        %v661 = vpack.c.bf16 %v650, %v649
        %v662 = vpack.c.bf16 %v652, %v651
        %v663 = vpack.c.bf16 %v654, %v653
        %v664 = vpack.c.bf16 %v656, %v655
        %v665 = vpack.c.bf16 %v658, %v657
        %v666 = vld [vmem:[%s5] sm:$0xf]
        %v667 = vld [vmem:[%s5 + $0x4] sm:$0xf]
        %v668 = vld [vmem:[%s5 + $0x8] sm:$0xf]
        %v669 = vld [vmem:[%s5 + $0xc] sm:$0xf]
        %v670 = vld [vmem:[%s5 + $0x10] sm:$0xf]
        %v671 = vld [vmem:[%s5 + $0x14] sm:$0xf]
        %v672 = vld [vmem:[%s5 + $0x18] sm:$0xf]
        %v673 = vld [vmem:[%s5 + $0x1c] sm:$0xf]
        %v674 = vld [vmem:[%s5 + $0x20] sm:$0xf]
        %v675 = vld [vmem:[%s5 + $0x24] sm:$0xf]
        %v676 = vld [vmem:[%s5 + $0x28] sm:$0xf]
        %v677 = vld [vmem:[%s5 + $0x2c] sm:$0xf]
        %v678 = vld [vmem:[%s5 + $0x30] sm:$0xf]
        %v679 = vld [vmem:[%s5 + $0x34] sm:$0xf]
        %v680 = vld [vmem:[%s5 + $0x38] sm:$0xf]
        %v681 = vld [vmem:[%s5 + $0x3c] sm:$0xf]
        %v682 = vld [vmem:[%s6] sm:$0x1]
        %v684 = vlaneseq
        %v685 = vshrl.u32 %v684, 7
        %v686 = vsub.s32 0, %v685
        %v687 = vrot.slane %v682, %v686
        %v705 = vunpack.c.l.b16 %v666
        %v706 = vunpack.c.l.b16 %v667
        %v707 = vunpack.c.l.b16 %v668
        %v708 = vunpack.c.l.b16 %v669
        %v709 = vunpack.c.l.b16 %v670
        %v710 = vunpack.c.l.b16 %v671
        %v711 = vunpack.c.l.b16 %v672
        %v712 = vunpack.c.l.b16 %v673
        %v713 = vunpack.c.l.b16 %v674
        %v714 = vunpack.c.l.b16 %v675
        %v715 = vunpack.c.l.b16 %v676
        %v716 = vunpack.c.l.b16 %v677
        %v717 = vunpack.c.l.b16 %v678
        %v718 = vunpack.c.l.b16 %v679
        %v719 = vunpack.c.l.b16 %v680
        %v720 = vunpack.c.l.b16 %v681
        %v721 = vpack.c.b16 %v706, %v705
        %v722 = vpack.c.b16 %v708, %v707
        %v723 = vpack.c.b16 %v710, %v709
        %v724 = vpack.c.b16 %v712, %v711
        %v725 = vpack.c.b16 %v714, %v713
        %v726 = vpack.c.b16 %v716, %v715
        %v727 = vpack.c.b16 %v718, %v717
        %v728 = vpack.c.b16 %v720, %v719
        %737 = vmatprep.subr.bf16.mxu0 0
        %738 = vmatpush1.bf16.msra.mxu0 %v728
        %739 = vmatprep.subr.bf16.mxu0 0
        %740 = vmatpush1.bf16.msra.mxu0 %v727
        %741 = vmatprep.subr.bf16.mxu0 0
        %742 = vmatpush1.bf16.msra.mxu0 %v726
        %743 = vmatprep.subr.bf16.mxu0 0
        %744 = vmatpush1.bf16.msra.mxu0 %v725
        %745 = vmatprep.subr.bf16.mxu0 0
        %746 = vmatpush1.bf16.msra.mxu0 %v724
        %747 = vmatprep.subr.bf16.mxu0 0
        %748 = vmatpush1.bf16.msra.mxu0 %v723
        %749 = vmatprep.subr.bf16.mxu0 0
        %750 = vmatpush1.bf16.msra.mxu0 %v722
        %751 = vmatprep.subr.bf16.mxu0 0
        %752 = vmatpush1.bf16.msra.mxu0 %v721
        %753 = vmatprep.subr.bf16.mxu0 0
        %754 = vmatpush2.bf16.msra.mxu0 0
        %755 = vmatprep.subr.bf16.mxu0 0
        %756 = vmatpush2.bf16.msra.mxu0 0
        %757 = vmatprep.subr.bf16.mxu0 0
        %758 = vmatpush2.bf16.msra.mxu0 0
        %759 = vmatprep.subr.bf16.mxu0 0
        %760 = vmatpush2.bf16.msra.mxu0 0
        %761 = vmatprep.subr.bf16.mxu0 0
        %762 = vmatpush2.bf16.msra.mxu0 0
        %763 = vmatprep.subr.bf16.mxu0 0
        %764 = vmatpush2.bf16.msra.mxu0 0
        %765 = vmatprep.subr.bf16.mxu0 0
        %766 = vmatpush2.bf16.msra.mxu0 0
        %767 = vmatprep.subr.bf16.mxu0 0
        %768 = vmatpush2.bf16.msra.mxu0 0
        %769 = vmatprep.mubr.bf16.mxu0 0
        %770 = vmatmul.mubr.bf16.gmra.mxu0 %v659
        %v771 = vpop.f32.mrf.mxu0
        %v772 = vadd.f32 %v687, %v771
        %v773 = vpop.f32.mrf.mxu0
        %v774 = vpop.f32.mrf.mxu0
        %v775 = vadd.f32 %v687, %v774
        %v776 = vpop.f32.mrf.mxu0
        %777 = vmatprep.mubr.bf16.mxu0 0
        %778 = vmatmul.mubr.bf16.gmra.mxu0 %v660
        %v779 = vpop.f32.mrf.mxu0
        %v780 = vadd.f32 %v687, %v779
        %v781 = vpop.f32.mrf.mxu0
        %v782 = vpop.f32.mrf.mxu0
        %v783 = vadd.f32 %v687, %v782
        %v784 = vpop.f32.mrf.mxu0
        %785 = vmatprep.mubr.bf16.mxu0 0
        %786 = vmatmul.mubr.bf16.gmra.mxu0 %v661
        %v787 = vpop.f32.mrf.mxu0
        %v788 = vadd.f32 %v687, %v787
        %v789 = vpop.f32.mrf.mxu0
        %v790 = vpop.f32.mrf.mxu0
        %v791 = vadd.f32 %v687, %v790
        %v792 = vpop.f32.mrf.mxu0
        %793 = vmatprep.mubr.bf16.mxu0 0
        %794 = vmatmul.mubr.bf16.gmra.mxu0 %v662
        %v795 = vpop.f32.mrf.mxu0
        %v796 = vadd.f32 %v687, %v795
        %v797 = vpop.f32.mrf.mxu0
        %v798 = vpop.f32.mrf.mxu0
        %v799 = vadd.f32 %v687, %v798
        %v800 = vpop.f32.mrf.mxu0
        %801 = vmatprep.mubr.bf16.mxu0 0
        %802 = vmatmul.mubr.bf16.gmra.mxu0 %v663
        %v803 = vpop.f32.mrf.mxu0
        %v804 = vadd.f32 %v687, %v803
        %v805 = vpop.f32.mrf.mxu0
        %v806 = vpop.f32.mrf.mxu0
        %v807 = vadd.f32 %v687, %v806
        %v808 = vpop.f32.mrf.mxu0
        %809 = vmatprep.mubr.bf16.mxu0 0
        %810 = vmatmul.mubr.bf16.gmra.mxu0 %v664
        %v811 = vpop.f32.mrf.mxu0
        %v812 = vadd.f32 %v687, %v811
        %v813 = vpop.f32.mrf.mxu0
        %v814 = vpop.f32.mrf.mxu0
        %v815 = vadd.f32 %v687, %v814
        %v816 = vpop.f32.mrf.mxu0
        %817 = vmatprep.mubr.bf16.mxu0 0
        %818 = vmatmul.mubr.bf16.gmra.mxu0 %v665
        %v819 = vpop.f32.mrf.mxu0
        %v820 = vadd.f32 %v687, %v819
        %v821 = vpop.f32.mrf.mxu0
        %v822 = vpop.f32.mrf.mxu0
        %v823 = vadd.f32 %v687, %v822
        %v824 = vpop.f32.mrf.mxu0
        %825 = vdwg.mxu0
        %v826 = vmax.f32 %v772, 0.0
        %v827 = vmax.f32 %v775, 0.0
        %v828 = vmax.f32 %v780, 0.0
        %v829 = vmax.f32 %v783, 0.0
        %v830 = vmax.f32 %v788, 0.0
        %v831 = vmax.f32 %v791, 0.0
        %v832 = vmax.f32 %v796, 0.0
        %v833 = vmax.f32 %v799, 0.0
        %v834 = vmax.f32 %v804, 0.0
        %v835 = vmax.f32 %v807, 0.0
        %v836 = vmax.f32 %v812, 0.0
        %v837 = vmax.f32 %v815, 0.0
        %v838 = vmax.f32 %v820, 0.0
        %v839 = vmax.f32 %v823, 0.0
        %840 = vst [vmem:[%s272] sm:$0xff] %v826
        %841 = vst [vmem:[%s272 + $0x8] sm:$0xff] %v827
        %842 = vst [vmem:[%s272 + $0x10] sm:$0xff] %v828
        %843 = vst [vmem:[%s272 + $0x18] sm:$0xff] %v829
        %844 = vst [vmem:[%s272 + $0x20] sm:$0xff] %v830
        %845 = vst [vmem:[%s272 + $0x28] sm:$0xff] %v831
        %846 = vst [vmem:[%s272 + $0x30] sm:$0xff] %v832
        %847 = vst [vmem:[%s272 + $0x38] sm:$0xff] %v833
        %848 = vst [vmem:[%s272 + $0x40] sm:$0xff] %v834
        %849 = vst [vmem:[%s272 + $0x48] sm:$0xff] %v835
        %850 = vst [vmem:[%s272 + $0x50] sm:$0xff] %v836
        %851 = vst [vmem:[%s272 + $0x58] sm:$0xff] %v837
        %852 = vst [vmem:[%s272 + $0x60] sm:$0xff] %v838
        %853 = vst [vmem:[%s272 + $0x68] sm:$0xff] %v839
        %s854 = sand.u32 %s181, 1
        %s855 = scalar_lea.sflag [#allocation3], %s854
        %s856 = sand.u32 %s181, 1
        %s857 = smul.addr %s856, 112
        %s858 = scalar_lea.vmem [#allocation2], %s857
        // Predicated region
        $region49: #{tpu_custom_call.1} parent=47 // pred_check
          %p859 = pneg %p191
        $region50: #{tpu_custom_call.1} parent=47 // pred_check_branch
          %861 = sbr.rel (%p859) target = $region52
        $region51: #{tpu_custom_call.1} parent=47 // pred_region
          %s862 = smul.u32 14, %s21
          %s864 = ssub.s32 1792, 1792
          %865 = vsyncadd %s855, %s864
          %s866 = smul.addr %s862, 128
          %s867 = scalar_lea.hbm %s7, %s866
          %s868 = sshll.u32 %s858, 4
          %s869 = int_to_ptr.vmem [resolvable:$true] %s868
          %874 = dma.vmem_to_hbm [thread:$0]  %s869, 1792, %s867, %s855, 128, 128, 8
        $region52: #{tpu_custom_call.1} parent=47 // pred_fallthru
          _
      $region48: #{tpu_custom_call.1} parent=5 // pred_fallthru
        _
      %p875 = scmp.le.s32.totalorder 2, %s16
      // Predicated region
      $region53: #{tpu_custom_call.1} parent=5 // pred_check
        %p876 = pneg %p875
      $region54: #{tpu_custom_call.1} parent=5 // pred_check_branch
        %878 = sbr.rel (%p876) target = $region56
      $region55: #{tpu_custom_call.1} parent=5 // pred_region
        %s879 = ssub.s32 %s16, 2
        // Predicated region
        $region57: #{tpu_custom_call.1} parent=55 // pred_check
          %p880 = pneg %p197
        $region58: #{tpu_custom_call.1} parent=55 // pred_check_branch
          %882 = sbr.rel (%p880) target = $region60
        $region59: #{tpu_custom_call.1} parent=55 // pred_region
          %s883 = sand.u32 %s182, 1
          %s884 = scalar_lea.sflag [#allocation3], %s883
          %s885 = sand.u32 %s182, 1
          %s886 = smul.addr %s885, 112
          %s887 = scalar_lea.vmem [#allocation2], %s886
          %888 = dma.done %s884, 1792
        $region60: #{tpu_custom_call.1} parent=55 // pred_fallthru
          _
      $region56: #{tpu_custom_call.1} parent=5 // pred_fallthru
        _
    $region6: #{tpu_custom_call.1} parent=1 // loop_footer
      %s20 = sadd.s32 1, %s16
    $region7: #{tpu_custom_call.1} parent=1 // loop_footer_branch
      %15 = sbr.rel target = $region3
    $region8: #{tpu_custom_call.1} parent=1 // loop_exit
      _
    %889 = vsyncpa [#allocation3], 1
    %s890 = scalar_lea.sflag [#allocation3], 1
    %891 = vsyncpa %s890, 1

</llo_original>
